<compile_context>
chip_gen: v7x
topology: tpu7x:2x2x1
jax: 0.10.0
libtpu: 0.0.40
codegen_flags: <defaults>
</compile_context>

<pallas_src>
import functools

import jax
import jax.numpy as jnp
from jax.experimental import pallas as pl
from jax.experimental.pallas import tpu as pltpu

GAMMA, ZETA = -0.1, 1.1              # AdaRound stretch parameters
_TARGET_BLOCK_ELEMS = 512 * 1024     # ~2 MiB f32 per array per buffer
_MAX_FULL_ROW_COLS = 4096            # below this, one block spans the full row
_VMEM_LIMIT_BYTES = 48 * 1024 * 1024


def _round_up(a, m):
    return ((a + m - 1) // m) * m


def _adaround_kernel(x_ref, alpha_ref, delta_ref, zp_ref, o_ref, *,
                     n_levels, soft_targets):
    delta = delta_ref[...]            # (bm, 1) per-channel scale
    zp = zp_ref[...]                  # (bm, 1) per-channel zero point

    # Fold the zero-point add/sub pair into the clip bounds (exact for these
    # small integer-valued f32 quantities):
    #   clamp(x_int + zp, 0, L-1) - zp == clamp(x_int, -zp, L-1-zp)
    lo = -zp
    hi = jnp.float32(n_levels - 1) - zp

    x = x_ref[...]                    # (bm, bd) f32
    x_floor = jnp.floor(x / delta)    # true divide: matches torch floor(x/delta)
    if soft_targets:
        h = jnp.clip(jax.nn.sigmoid(alpha_ref[...]) * (ZETA - GAMMA) + GAMMA,
                     0.0, 1.0)
    else:
        h = (alpha_ref[...] >= 0.0).astype(jnp.float32)
    o_ref[...] = jnp.clip(x_floor + h, lo, hi) * delta


def adaround_forward(x2d, alpha2d, delta, zero_point, *, n_levels,
                     soft_targets=False, block_rows=None, block_cols=None):
    """x2d/alpha2d: (C, D) f32; delta/zero_point: (C, 1) f32 per-channel."""
    C, D = x2d.shape

    # ---- column blocking: lane-dense without any wrapper padding -----------
    if block_cols is None:
        if D <= _MAX_FULL_ROW_COLS:
            block_cols = D            # equals full array dim -> layout-legal
        else:
            block_cols = 2048         # multiple of 128; ragged tail is fine
    n_col = pl.cdiv(D, block_cols)

    # ---- row blocking: multiples of 8, ragged tail handled by Pallas -------
    if block_rows is None:
        block_rows = max(8, _round_up(_TARGET_BLOCK_ELEMS // max(block_cols, 1), 8))
        block_rows = min(block_rows, _round_up(C, 8))
    else:
        block_rows = max(8, _round_up(block_rows, 8))
    n_row = pl.cdiv(C, block_rows)

    # Keep >= 2 grid steps when possible (v7x shards "parallel" axes over 2 TCs).
    if n_row * n_col == 1 and C > 8:
        block_rows = _round_up(pl.cdiv(C, 2), 8)
        n_row = pl.cdiv(C, block_rows)

    grid = (n_row, n_col)
    tile_spec = pl.BlockSpec((block_rows, block_cols), lambda i, j: (i, j))
    # Per-channel params: tiny (block_rows, 1) block, re-DMA'd only when the
    # row block index changes (constant over the inner column axis).
    chan_spec = pl.BlockSpec((block_rows, 1), lambda i, j: (i, 0))

    kern = functools.partial(_adaround_kernel, n_levels=n_levels,
                             soft_targets=soft_targets)
    # TODO(synk): on v5e (lowest HBM BW) alpha could be fed as bf16 and the
    # output emitted as bf16 to cut streaming traffic from 12 to 8 B/elem.
    return pl.pallas_call(
        kern,
        out_shape=jax.ShapeDtypeStruct((C, D), jnp.float32),
        grid_spec=pltpu.PrefetchScalarGridSpec(
            num_scalar_prefetch=0,
            grid=grid,
            in_specs=[tile_spec, tile_spec, chan_spec, chan_spec],
            out_specs=tile_spec,
        ),
        compiler_params=pltpu.CompilerParams(
            dimension_semantics=("parallel", "parallel"),
            vmem_limit_bytes=_VMEM_LIMIT_BYTES),
    )(x2d, alpha2d, delta, zero_point)


def init_quant_params(w2d, n_bits=4):
    """UniformAffineQuantizer-style per-(output)channel asymmetric params."""
    n_levels = 2 ** n_bits
    x_min = jnp.minimum(jnp.min(w2d, axis=1, keepdims=True), 0.0)
    x_max = jnp.maximum(jnp.max(w2d, axis=1, keepdims=True), 0.0)
    delta = (x_max - x_min) / float(n_levels - 1)
    delta = jnp.maximum(delta, 1e-8)
    zero_point = jnp.round(-x_min / delta)
    return delta.astype(jnp.float32), zero_point.astype(jnp.float32), n_levels


def init_alpha(w2d, delta):
    """alpha = -log((zeta-gamma)/(rest-gamma) - 1), rest = frac(w/delta)."""
    x_floor = jnp.floor(w2d / delta)
    rest = w2d / delta - x_floor
    return -jnp.log((ZETA - GAMMA) / (rest - GAMMA) - 1.0)


def reference_forward(x2d, alpha2d, delta, zp, n_levels, soft_targets):
    x_floor = jnp.floor(x2d / delta)
    if soft_targets:
        h = jnp.clip(jax.nn.sigmoid(alpha2d) * (ZETA - GAMMA) + GAMMA, 0.0, 1.0)
    else:
        h = (alpha2d >= 0.0).astype(jnp.float32)
    x_quant = jnp.clip(x_floor + h + zp, 0.0, float(n_levels - 1))
    return (x_quant - zp) * delta


def _run_case(key, conv_shape, n_bits=4):
    C_out, C_in, Kh, Kw = conv_shape
    w = jax.random.normal(key, conv_shape, dtype=jnp.float32) * 0.5
    w2d = w.reshape(C_out, C_in * Kh * Kw)
    delta, zero_point, n_levels = init_quant_params(w2d, n_bits=n_bits)
    alpha2d = init_alpha(w2d, delta)          # nn.Parameter init (deterministic)

    for soft in (False, True):
        out2d = adaround_forward(w2d, alpha2d, delta, zero_point,
                                 n_levels=n_levels, soft_targets=soft)
        out2d = jax.block_until_ready(out2d)
        ref = reference_forward(w2d, alpha2d, delta, zero_point, n_levels, soft)
        assert out2d.shape == w2d.shape
        assert jnp.allclose(out2d, ref, atol=1e-5, rtol=1e-5), \
            f"mismatch shape={conv_shape} soft_targets={soft}"
    return out2d.reshape(conv_shape)          # back to conv weight layout


if __name__ == "__main__":
    key = jax.random.PRNGKey(0)
    k0, k1 = jax.random.split(key)
    # Small conv-like weight tensors: (C_out, C_in, Kh, Kw).
    _ = _run_case(k0, (16, 8, 3, 3))          # aligned rows, short ragged lanes
    _ = _run_case(k1, (12, 5, 3, 3))          # ragged row tail + ragged lanes
    print("KERNEL_OK")
</pallas_src>

<mosaic_0001>
module attributes {stable_mosaic.version = 11 : i64} {
  func.func @_adaround_kernel(%arg0: i32, %arg1: i32, %arg2: memref<8x72xf32, #tpu.memory_space<vmem>>, %arg3: memref<8x72xf32, #tpu.memory_space<vmem>>, %arg4: memref<8x1xf32, #tpu.memory_space<vmem>>, %arg5: memref<8x1xf32, #tpu.memory_space<vmem>>, %arg6: memref<8x72xf32, #tpu.memory_space<vmem>>) attributes {dimension_semantics = [#tpu.dimension_semantics<parallel>, #tpu.dimension_semantics<parallel>], iteration_bounds = array<i64: 2, 1>, scalar_prefetch = 0 : i64, scratch_operands = 0 : i64, tpu.core_type = #tpu.core_type<tc>, window_params = [{transform_indices = @transform_0, window_bounds = array<i64: 8, 72>}, {transform_indices = @transform_1, window_bounds = array<i64: 8, 72>}, {transform_indices = @transform_2, window_bounds = array<i64: 8, 1>}, {transform_indices = @transform_3, window_bounds = array<i64: 8, 1>}, {transform_indices = @transform_4, window_bounds = array<i64: 8, 72>}]} {
    %c0 = arith.constant 0 : index
    %c0_0 = arith.constant 0 : index
    %0 = vector.load %arg4[%c0, %c0_0] : memref<8x1xf32, #tpu.memory_space<vmem>>, vector<8x1xf32>
    %c0_1 = arith.constant 0 : index
    %c0_2 = arith.constant 0 : index
    %1 = vector.load %arg5[%c0_1, %c0_2] : memref<8x1xf32, #tpu.memory_space<vmem>>, vector<8x1xf32>
    %cst = arith.constant 0.000000e+00 : f32
    %2 = vector.broadcast %cst : f32 to vector<8x1xf32>
    %3 = arith.subf %2, %1 : vector<8x1xf32>
    %cst_3 = arith.constant 1.500000e+01 : f32
    %4 = vector.broadcast %cst_3 : f32 to vector<8x1xf32>
    %5 = arith.subf %4, %1 : vector<8x1xf32>
    %c0_4 = arith.constant 0 : index
    %c0_5 = arith.constant 0 : index
    %6 = vector.load %arg2[%c0_4, %c0_5] : memref<8x72xf32, #tpu.memory_space<vmem>>, vector<8x72xf32>
    %7 = vector.broadcast %0 : vector<8x1xf32> to vector<8x72xf32>
    %8 = arith.divf %6, %7 : vector<8x72xf32>
    %9 = math.floor %8 : vector<8x72xf32>
    %c0_6 = arith.constant 0 : index
    %c0_7 = arith.constant 0 : index
    %10 = vector.load %arg3[%c0_6, %c0_7] : memref<8x72xf32, #tpu.memory_space<vmem>>, vector<8x72xf32>
    %cst_8 = arith.constant 0.000000e+00 : f32
    %11 = vector.broadcast %cst_8 : f32 to vector<8x72xf32>
    %12 = arith.cmpf oge, %10, %11 : vector<8x72xf32>
    %13 = arith.extui %12 : vector<8x72xi1> to vector<8x72xi32>
    %14 = arith.sitofp %13 : vector<8x72xi32> to vector<8x72xf32>
    %15 = arith.addf %9, %14 : vector<8x72xf32>
    %16 = vector.broadcast %3 : vector<8x1xf32> to vector<8x72xf32>
    %17 = arith.maximumf %16, %15 : vector<8x72xf32>
    %18 = vector.broadcast %5 : vector<8x1xf32> to vector<8x72xf32>
    %19 = arith.minimumf %18, %17 : vector<8x72xf32>
    %20 = vector.broadcast %0 : vector<8x1xf32> to vector<8x72xf32>
    %21 = arith.mulf %19, %20 : vector<8x72xf32>
    %c0_9 = arith.constant 0 : index
    %c0_10 = arith.constant 0 : index
    %22 = vector.load %arg6[%c0_9, %c0_10] : memref<8x72xf32, #tpu.memory_space<vmem>>, vector<8x72xf32>
    tpu.vector_store %arg6[%c0_9, %c0_10], %21 {strides = array<i32>} : memref<8x72xf32, #tpu.memory_space<vmem>>, vector<8x72xf32>,
    return
  }
  func.func @transform_0(%arg0: i32, %arg1: i32) -> (i32, i32) {
    %c0_i32 = arith.constant 0 : i32
    return %arg0, %arg1 : i32, i32
  }
  func.func @transform_1(%arg0: i32, %arg1: i32) -> (i32, i32) {
    %c0_i32 = arith.constant 0 : i32
    return %arg0, %arg1 : i32, i32
  }
  func.func @transform_2(%arg0: i32, %arg1: i32) -> (i32, i32) {
    %c0_i32 = arith.constant 0 : i32
    %c0_i32_0 = arith.constant 0 : i32
    return %arg0, %c0_i32 : i32, i32
  }
  func.func @transform_3(%arg0: i32, %arg1: i32) -> (i32, i32) {
    %c0_i32 = arith.constant 0 : i32
    %c0_i32_0 = arith.constant 0 : i32
    return %arg0, %c0_i32 : i32, i32
  }
  func.func @transform_4(%arg0: i32, %arg1: i32) -> (i32, i32) {
    %c0_i32 = arith.constant 0 : i32
    return %arg0, %arg1 : i32, i32
  }
}

</mosaic_0001>

<llo_original>
// kernel: tpu_custom_call.1
$region0: #{tpu_custom_call.1}
  #allocation0 [shape = 'u32[]', space=smem, size = 0x4, offset = 0x4, fixed_abs, tag = 'smem constant byte address 0x4 - core index']
  #allocation1 [shape = 'u32[144,128]{1,0:T(1,128)}', space=vmem, size = 0x12000, scoped, tag = 'internal scratch']
  %s0 = inlined_call_operand.vmem [shape: f32[16,72], index: 0, kind: input, shape index: {}]
  %s1 = inlined_call_operand.vmem [shape: f32[16,72], index: 1, kind: input, shape index: {}]
  %s2 = inlined_call_operand.vmem [shape: f32[16,1], index: 2, kind: input, shape index: {}]
  %s3 = inlined_call_operand.vmem [shape: f32[16,1], index: 3, kind: input, shape index: {}]
  %s4 = inlined_call_operand.hbm [shape: f32[16,72], index: 4, kind: output, shape index: {}]
  %s5 = sld [smem:[#allocation0]]
  $region49: #{tpu_custom_call.1} parent=0
    _
  %s7 = ssub.s32 1, %s5
  %s8 = scalar_select 0, %s7, %s5
  $region1: #{tpu_custom_call.1} parent=0
    #allocation2 [shape = 'u8[8192]{0}', space=vmem, size = 0x2000, scoped, tag = 'output window, operand 0']
    #allocation3 [shape = 's32[2]{0}', space=sflag, size = 0x8, scoped, tag = 'scoped memory for tpu_custom_call.1']
    %9 = vsyncpa [#allocation3], 0
    %s10 = scalar_lea.sflag [#allocation3], 1
    %11 = vsyncpa %s10, 0
    loop: start=0, step=1, limit=4
    $region2: #{tpu_custom_call.1} parent=1 // loop_pre_header
      _
    $region3: #{tpu_custom_call.1} parent=1 // loop_header
      %s13 = sphi 0, %s17
      %p14 = scmp.ge.s32.totalorder %s13, 4
      %s20 = sphi 0, %s32
      %s21 = sphi 0, %s28
      %s22 = sphi 0, %s20
      %s23 = sphi 0, %s21
      %s24 = sphi 0, %s22
      %s25 = sphi 0, %s23
      %s37 = sphi 0, %s39
      %s40 = sphi 0, %s37
      %s41 = sphi 0, %s40
      %s57 = sphi 0, %s41
      %s65 = sphi 0, %s67
      %s68 = sphi 0, %s65
      %s69 = sphi 0, %s68
      %s85 = sphi 0, %s69
      %s91 = sphi 0, %s93
      %s94 = sphi 0, %s91
      %s95 = sphi 0, %s94
      %s111 = sphi 0, %s95
      %s117 = sphi 0, %s119
      %s120 = sphi 0, %s117
      %s121 = sphi 0, %s120
      %s137 = sphi 0, %s121
      %s145 = sphi 0, %s147
      %s148 = sphi 0, %s145
      %s149 = sphi 0, %s148
      %s165 = sphi 0, %s149
    $region4: #{tpu_custom_call.1} parent=1 // loop_header_branch
      %16 = sbr.rel (%p14) target = $region8
    $region5: #{tpu_custom_call.1} parent=1 // loop_body
      %s18 = ssub.s32 %s13, 1
      %s19 = ssub.s32 %s13, 2
      %s26 = sadd.s32 1, %s21
      %p27 = scmp.ge.s32.totalorder %s26, 1
      %s28 = scalar_select %p27, 0, %s26
      %s29 = sadd.s32 1, %s20
      %s30 = scalar_select %p27, %s29, %s20
      %p31 = scmp.ge.s32.totalorder %s30, 2
      %s32 = scalar_select %p31, 0, %s30
      %s33 = ssub.s32 %s20, %s32
      %s34 = ssub.s32 %s21, %s28
      %s35 = sor.u32 %s33, %s34
      %p36 = scmp.eq.s32.totalorder %s35, 0
      %s38 = sadd.s32 %s37, 1
      %s39 = scalar_select %p36, %s37, %s38
      %p42 = pneg %p36
      %p43 = scmp.eq.s32.totalorder %s13, 1
      %p44 = por %p42, %p43
      %p45 = scmp.ne.s32.totalorder %s37, %s40
      %p46 = scmp.eq.s32.totalorder %s13, 0
      %p47 = por %p45, %p46
      %p48 = scmp.ne.s32.totalorder %s37, %s40
      %p49 = scmp.eq.s32.totalorder %s18, 1
      %p50 = por %p48, %p49
      %p51 = scmp.ne.s32.totalorder %s40, %s41
      %p52 = scmp.eq.s32.totalorder %s18, 0
      %p53 = por %p51, %p52
      %p54 = scmp.ne.s32.totalorder %s40, %s41
      %p55 = scmp.eq.s32.totalorder %s19, 1
      %p56 = por %p54, %p55
      %p58 = scmp.ne.s32.totalorder %s41, %s57
      %p59 = scmp.eq.s32.totalorder %s19, 0
      %p60 = por %p58, %p59
      %s61 = ssub.s32 %s20, %s32
      %s62 = ssub.s32 %s21, %s28
      %s63 = sor.u32 %s61, %s62
      %p64 = scmp.eq.s32.totalorder %s63, 0
      %s66 = sadd.s32 %s65, 1
      %s67 = scalar_select %p64, %s65, %s66
      %p70 = pneg %p64
      %p71 = scmp.eq.s32.totalorder %s13, 1
      %p72 = por %p70, %p71
      %p73 = scmp.ne.s32.totalorder %s65, %s68
      %p74 = scmp.eq.s32.totalorder %s13, 0
      %p75 = por %p73, %p74
      %p76 = scmp.ne.s32.totalorder %s65, %s68
      %p77 = scmp.eq.s32.totalorder %s18, 1
      %p78 = por %p76, %p77
      %p79 = scmp.ne.s32.totalorder %s68, %s69
      %p80 = scmp.eq.s32.totalorder %s18, 0
      %p81 = por %p79, %p80
      %p82 = scmp.ne.s32.totalorder %s68, %s69
      %p83 = scmp.eq.s32.totalorder %s19, 1
      %p84 = por %p82, %p83
      %p86 = scmp.ne.s32.totalorder %s69, %s85
      %p87 = scmp.eq.s32.totalorder %s19, 0
      %p88 = por %p86, %p87
      %s89 = ssub.s32 %s20, %s32
      %p90 = scmp.eq.s32.totalorder %s89, 0
      %s92 = sadd.s32 %s91, 1
      %s93 = scalar_select %p90, %s91, %s92
      %p96 = pneg %p90
      %p97 = scmp.eq.s32.totalorder %s13, 1
      %p98 = por %p96, %p97
      %p99 = scmp.ne.s32.totalorder %s91, %s94
      %p100 = scmp.eq.s32.totalorder %s13, 0
      %p101 = por %p99, %p100
      %p102 = scmp.ne.s32.totalorder %s91, %s94
      %p103 = scmp.eq.s32.totalorder %s18, 1
      %p104 = por %p102, %p103
      %p105 = scmp.ne.s32.totalorder %s94, %s95
      %p106 = scmp.eq.s32.totalorder %s18, 0
      %p107 = por %p105, %p106
      %p108 = scmp.ne.s32.totalorder %s94, %s95
      %p109 = scmp.eq.s32.totalorder %s19, 1
      %p110 = por %p108, %p109
      %p112 = scmp.ne.s32.totalorder %s95, %s111
      %p113 = scmp.eq.s32.totalorder %s19, 0
      %p114 = por %p112, %p113
      %s115 = ssub.s32 %s20, %s32
      %p116 = scmp.eq.s32.totalorder %s115, 0
      %s118 = sadd.s32 %s117, 1
      %s119 = scalar_select %p116, %s117, %s118
      %p122 = pneg %p116
      %p123 = scmp.eq.s32.totalorder %s13, 1
      %p124 = por %p122, %p123
      %p125 = scmp.ne.s32.totalorder %s117, %s120
      %p126 = scmp.eq.s32.totalorder %s13, 0
      %p127 = por %p125, %p126
      %p128 = scmp.ne.s32.totalorder %s117, %s120
      %p129 = scmp.eq.s32.totalorder %s18, 1
      %p130 = por %p128, %p129
      %p131 = scmp.ne.s32.totalorder %s120, %s121
      %p132 = scmp.eq.s32.totalorder %s18, 0
      %p133 = por %p131, %p132
      %p134 = scmp.ne.s32.totalorder %s120, %s121
      %p135 = scmp.eq.s32.totalorder %s19, 1
      %p136 = por %p134, %p135
      %p138 = scmp.ne.s32.totalorder %s121, %s137
      %p139 = scmp.eq.s32.totalorder %s19, 0
      %p140 = por %p138, %p139
      %s141 = ssub.s32 %s20, %s32
      %s142 = ssub.s32 %s21, %s28
      %s143 = sor.u32 %s141, %s142
      %p144 = scmp.eq.s32.totalorder %s143, 0
      %s146 = sadd.s32 %s145, 1
      %s147 = scalar_select %p144, %s145, %s146
      %p150 = pneg %p144
      %p151 = scmp.eq.s32.totalorder %s13, 1
      %p152 = por %p150, %p151
      %p153 = scmp.ne.s32.totalorder %s145, %s148
      %p154 = scmp.eq.s32.totalorder %s13, 0
      %p155 = por %p153, %p154
      %p156 = scmp.ne.s32.totalorder %s145, %s148
      %p157 = scmp.eq.s32.totalorder %s18, 1
      %p158 = por %p156, %p157
      %p159 = scmp.ne.s32.totalorder %s148, %s149
      %p160 = scmp.eq.s32.totalorder %s18, 0
      %p161 = por %p159, %p160
      %p162 = scmp.ne.s32.totalorder %s148, %s149
      %p163 = scmp.eq.s32.totalorder %s19, 1
      %p164 = por %p162, %p163
      %p166 = scmp.ne.s32.totalorder %s149, %s165
      %p167 = scmp.eq.s32.totalorder %s19, 0
      %p168 = por %p166, %p167
      %p169 = scmp.le.s32.totalorder 1, %s13
      %p170 = scmp.lt.s32.totalorder %s13, 3
      %p171 = pnand %p169, %p170
      %p172 = pneg %p171
      // Predicated region
      $region9: #{tpu_custom_call.1} parent=5 // pred_check
        _
      $region10: #{tpu_custom_call.1} parent=5 // pred_check_branch
        %174 = sbr.rel (%p171) target = $region12
      $region11: #{tpu_custom_call.1} parent=5 // pred_region
        %s175 = ssub.s32 %s13, 1
      $region12: #{tpu_custom_call.1} parent=5 // pred_fallthru
        _
      %p176 = scmp.lt.s32.totalorder %s13, 2
      // Predicated region
      $region13: #{tpu_custom_call.1} parent=5 // pred_check
        %p177 = pneg %p176
      $region14: #{tpu_custom_call.1} parent=5 // pred_check_branch
        %179 = sbr.rel (%p177) target = $region16
      $region15: #{tpu_custom_call.1} parent=5 // pred_region
        // Predicated region
        $region17: #{tpu_custom_call.1} parent=15 // pred_check
          %p180 = pneg %p47
        $region18: #{tpu_custom_call.1} parent=15 // pred_check_branch
          %182 = sbr.rel (%p180) target = $region20
        $region19: #{tpu_custom_call.1} parent=15 // pred_region
          %p183 = scmp.lt.s32.totalorder %s20, 1
          %s184 = scalar_select %p183, %s20, 1
          %p185 = scmp.lt.s32.totalorder %s21, 0
          %s186 = scalar_select %p185, %s21, 0
          %s187 = sadd.s32 %s186, %s184
          %s188 = smul.addr %s187, 8
          %s189 = scalar_lea.vmem %s0, %s188
        $region20: #{tpu_custom_call.1} parent=15 // pred_fallthru
          _
        // Predicated region
        $region21: #{tpu_custom_call.1} parent=15 // pred_check
          %p190 = pneg %p75
        $region22: #{tpu_custom_call.1} parent=15 // pred_check_branch
          %192 = sbr.rel (%p190) target = $region24
        $region23: #{tpu_custom_call.1} parent=15 // pred_region
          %p193 = scmp.lt.s32.totalorder %s20, 1
          %s194 = scalar_select %p193, %s20, 1
          %p195 = scmp.lt.s32.totalorder %s21, 0
          %s196 = scalar_select %p195, %s21, 0
          %s197 = sadd.s32 %s196, %s194
          %s198 = smul.addr %s197, 8
          %s199 = scalar_lea.vmem %s1, %s198
        $region24: #{tpu_custom_call.1} parent=15 // pred_fallthru
          _
        // Predicated region
        $region25: #{tpu_custom_call.1} parent=15 // pred_check
          %p200 = pneg %p101
        $region26: #{tpu_custom_call.1} parent=15 // pred_check_branch
          %202 = sbr.rel (%p200) target = $region28
        $region27: #{tpu_custom_call.1} parent=15 // pred_region
          %p203 = scmp.lt.s32.totalorder %s20, 1
          %s204 = scalar_select %p203, %s20, 1
          %s205 = smul.addr %s204, 8
          %s206 = scalar_lea.vmem %s2, %s205
        $region28: #{tpu_custom_call.1} parent=15 // pred_fallthru
          _
        // Predicated region
        $region29: #{tpu_custom_call.1} parent=15 // pred_check
          %p207 = pneg %p127
        $region30: #{tpu_custom_call.1} parent=15 // pred_check_branch
          %209 = sbr.rel (%p207) target = $region32
        $region31: #{tpu_custom_call.1} parent=15 // pred_region
          %p210 = scmp.lt.s32.totalorder %s20, 1
          %s211 = scalar_select %p210, %s20, 1
          %s212 = smul.addr %s211, 8
          %s213 = scalar_lea.vmem %s3, %s212
        $region32: #{tpu_custom_call.1} parent=15 // pred_fallthru
          _
      $region16: #{tpu_custom_call.1} parent=5 // pred_fallthru
        _
      %p214 = scmp.le.s32.totalorder 1, %s13
      %p215 = scmp.lt.s32.totalorder %s13, 3
      %p216 = pnand %p214, %p215
      %p217 = pneg %p216
      // Predicated region
      $region33: #{tpu_custom_call.1} parent=5 // pred_check
        _
      $region34: #{tpu_custom_call.1} parent=5 // pred_check_branch
        %219 = sbr.rel (%p216) target = $region36
      $region35: #{tpu_custom_call.1} parent=5 // pred_region
        %s220 = ssub.s32 %s13, 1
        %p221 = scmp.lt.s32.totalorder %s22, 1
        %s222 = scalar_select %p221, %s22, 1
        %p223 = scmp.lt.s32.totalorder %s23, 0
        %s224 = scalar_select %p223, %s23, 0
        %s225 = sadd.s32 %s224, %s222
        %s226 = smul.addr %s225, 8
        %s227 = scalar_lea.vmem %s0, %s226
        %p228 = pneg %p53
        %p229 = pneg %p50
        %p230 = scmp.lt.s32.totalorder %s22, 1
        %s231 = scalar_select %p230, %s22, 1
        %p232 = scmp.lt.s32.totalorder %s23, 0
        %s233 = scalar_select %p232, %s23, 0
        %s234 = sadd.s32 %s233, %s231
        %s235 = smul.addr %s234, 8
        %s236 = scalar_lea.vmem %s1, %s235
        %p237 = pneg %p81
        %p238 = pneg %p78
        %p239 = scmp.lt.s32.totalorder %s22, 1
        %s240 = scalar_select %p239, %s22, 1
        %s241 = smul.addr %s240, 8
        %s242 = scalar_lea.vmem %s2, %s241
        %p243 = pneg %p107
        %p244 = pneg %p104
        %p245 = scmp.lt.s32.totalorder %s22, 1
        %s246 = scalar_select %p245, %s22, 1
        %s247 = smul.addr %s246, 8
        %s248 = scalar_lea.vmem %s3, %s247
        %p249 = pneg %p133
        %p250 = pneg %p130
        %p251 = pneg %p161
        %p252 = pneg %p158
        %s253 = sand.u32 %s148, 1
        %s254 = scalar_lea.sflag [#allocation3], %s253
        %s255 = sand.u32 %s148, 1
        %s256 = smul.addr %s255, 8
        %s257 = scalar_lea.vmem [#allocation2], %s256
        %p258 = scmp.lt.s32.totalorder %s22, 1
        %s259 = scalar_select %p258, %s22, 1
        %p260 = scmp.lt.s32.totalorder %s23, 0
        %s261 = scalar_select %p260, %s23, 0
        %s262 = sadd.s32 %s261, %s259
        %s263 = smul.addr %s262, 8
        %s264 = scalar_lea.vmem %s0, %s263
        %p265 = scmp.lt.s32.totalorder %s22, 1
        %s266 = scalar_select %p265, %s22, 1
        %p267 = scmp.lt.s32.totalorder %s23, 0
        %s268 = scalar_select %p267, %s23, 0
        %s269 = sadd.s32 %s268, %s266
        %s270 = smul.addr %s269, 8
        %s271 = scalar_lea.vmem %s1, %s270
        %p272 = scmp.lt.s32.totalorder %s22, 1
        %s273 = scalar_select %p272, %s22, 1
        %s274 = smul.addr %s273, 8
        %s275 = scalar_lea.vmem %s2, %s274
        %p276 = scmp.lt.s32.totalorder %s22, 1
        %s277 = scalar_select %p276, %s22, 1
        %s278 = smul.addr %s277, 8
        %s279 = scalar_lea.vmem %s3, %s278
        %v280 = vld [vmem:[%s275] sm:$0xff]
        %v281 = vld [vmem:[%s279] sm:$0xff]
        %v282 = vsub.f32 0.0, %v281
        %v283 = vsub.f32 15.0, %v281
        %v284 = vld [vmem:[%s264] sm:$0xff]
        %286 = vset.pattern.permute.xlu0 0
        %287 = vperm.xlu0 %286, %v280
        %v288 = vpop.permute.xlu0 %287
        %v290 = vrcp.pop %v288
        %v291 = vmul.f32 %v284, %v290
        %v292 = vfloor.f32 %v291
        %v293 = vld [vmem:[%s271] sm:$0xff]
        %vm294 = vcmp.ge.f32.partialorder %v293, 0.0
        %v295 = vsel %vm294, 1, 0
        %v296 = vcvt.s32.f32 %v295
        %v297 = vadd.f32 %v292, %v296
        %299 = vset.pattern.permute.xlu0 0
        %300 = vperm.xlu0 %299, %v282
        %v301 = vpop.permute.xlu0 %300
        %v303 = vmax.f32 %v301, %v297
        %305 = vset.pattern.permute.xlu0 0
        %306 = vperm.xlu0 %305, %v283
        %v307 = vpop.permute.xlu0 %306
        %v309 = vmin.f32 %v307, %v303
        %v310 = vmul.f32 %v309, %v288
        %vm311 = vcmask 588800
        %312 = vst.msk [vmem:[%s257] sm:$0xff] %vm311, %v310
        %s313 = sand.u32 %s148, 1
        %s314 = scalar_lea.sflag [#allocation3], %s313
        %s315 = sand.u32 %s148, 1
        %s316 = smul.addr %s315, 8
        %s317 = scalar_lea.vmem [#allocation2], %s316
        // Predicated region
        $region37: #{tpu_custom_call.1} parent=35 // pred_check
          %p318 = pneg %p158
        $region38: #{tpu_custom_call.1} parent=35 // pred_check_branch
          %320 = sbr.rel (%p318) target = $region40
        $region39: #{tpu_custom_call.1} parent=35 // pred_region
          %s322 = ssub.s32 128, 128
          %323 = vsyncadd %s314, %s322
          %s324 = sadd.s32 %s23, %s22
          %s325 = smul.addr %s324, 128
          %s326 = scalar_lea.hbm %s4, %s325
          %s328 = sshll.u32 %s317, 4
          %s329 = int_to_ptr.vmem [resolvable:$true] %s328
          %331 = dma.vmem_to_hbm [thread:$0]  %s329, 128, %s326, %s314
        $region40: #{tpu_custom_call.1} parent=35 // pred_fallthru
          _
      $region36: #{tpu_custom_call.1} parent=5 // pred_fallthru
        _
      %p332 = scmp.le.s32.totalorder 2, %s13
      // Predicated region
      $region41: #{tpu_custom_call.1} parent=5 // pred_check
        %p333 = pneg %p332
      $region42: #{tpu_custom_call.1} parent=5 // pred_check_branch
        %335 = sbr.rel (%p333) target = $region44
      $region43: #{tpu_custom_call.1} parent=5 // pred_region
        %s336 = ssub.s32 %s13, 2
        // Predicated region
        $region45: #{tpu_custom_call.1} parent=43 // pred_check
          %p337 = pneg %p164
        $region46: #{tpu_custom_call.1} parent=43 // pred_check_branch
          %339 = sbr.rel (%p337) target = $region48
        $region47: #{tpu_custom_call.1} parent=43 // pred_region
          %s340 = sand.u32 %s149, 1
          %s341 = scalar_lea.sflag [#allocation3], %s340
          %s342 = sand.u32 %s149, 1
          %s343 = smul.addr %s342, 8
          %s344 = scalar_lea.vmem [#allocation2], %s343
          %345 = dma.done %s341, 128
        $region48: #{tpu_custom_call.1} parent=43 // pred_fallthru
          _
      $region44: #{tpu_custom_call.1} parent=5 // pred_fallthru
        _
    $region6: #{tpu_custom_call.1} parent=1 // loop_footer
      %s17 = sadd.s32 1, %s13
    $region7: #{tpu_custom_call.1} parent=1 // loop_footer_branch
      %12 = sbr.rel target = $region3
    $region8: #{tpu_custom_call.1} parent=1 // loop_exit
      _
    %346 = vsyncpa [#allocation3], 1
    %s347 = scalar_lea.sflag [#allocation3], 1
    %348 = vsyncpa %s347, 1

</llo_original>
